<compile_context>
chip_gen: v7x
topology: tpu7x:2x2x1
jax: 0.10.0
libtpu: 0.0.40
codegen_flags: <defaults>
</compile_context>

<pallas_src>
import jax
import jax.numpy as jnp
from jax import lax
from jax.experimental import pallas as pl
from jax.experimental.pallas import tpu as pltpu

# ---- static configuration (small synthetic shapes) --------------------------
N = 2                               # batch
PLANES = 4
EXPANSION = 4
INPLANES = PLANES * EXPANSION       # 16; downsample=None requires inplanes == planes*4
WIDTH = PLANES                      # base_width=64, groups=1 -> width == planes
COUT = PLANES * EXPANSION           # 16
H = W = 16
P = H * W                           # 256 spatial positions per sample
NP = N * P                          # 512 lanes (batch folded into the lane axis)
WPAD = 8                            # bottleneck width padded to one sublane group
NBLOCKS = 3
BLOCK_I = 1                         # block_i fixed at construction time in PyTorch
EPS = 1e-5

assert INPLANES == COUT, "identity residual path requires inplanes == planes*expansion"

_TAPS = [(dy, dx) for dy in (-1, 0, 1) for dx in (-1, 0, 1)]   # t = (dy+1)*3 + (dx+1)

K1 = INPLANES + WPAD       # 24: conv1 contraction (x channels + bias ones-block)
K2 = 9 * WPAD + WPAD       # 80: conv2 contraction (9 taps + bias ones-block)
K3 = WPAD + WPAD           # 16: conv3 contraction (h2 + bias ones-block)


# ---- Pallas kernel -----------------------------------------------------------
def _bottleneck_kernel(x_ref,      # VMEM (K1, NP)  [x channels | ones row | zeros]
                       w1_ref,     # VMEM (WPAD, K1)   bn1 scale+shift folded
                       w2_ref,     # VMEM (WPAD, K2)   bn2 scale+shift folded
                       w3_ref,     # VMEM (COUT, K3)   bn3 scale+shift folded
                       mask_ref,   # VMEM (9, NP)      0/1 border masks per tap
                       gam_ref,    # VMEM (1, NP)      per-lane decay factor
                       o_ref,      # VMEM (COUT, NP)
                       patch_ref,  # VMEM scratch (K2, NP)
                       h2_ref):    # VMEM scratch (K3, NP)
    g = gam_ref[...]                                            # (1, NP)

    # ---- conv1 (1x1) + bn1 (folded) + DecayReLU --------------------------------
    h1 = jnp.dot(w1_ref[...], x_ref[...],
                 preferred_element_type=jnp.float32)            # (WPAD, NP)
    h1 = jnp.maximum(h1, 0.0) * g

    # ---- conv2 (3x3, pad=1): 9 lane-rolled taps streamed into the VMEM patch ---
    # bias ones/zeros block reused from the x augmentation rows (tile-aligned copy)
    patch_ref[9 * WPAD:10 * WPAD, :] = x_ref[INPLANES:INPLANES + WPAD, :]
    for t, (dy, dx) in enumerate(_TAPS):
        k = dy * W + dx                                         # lane offset of tap
        r = h1 if k == 0 else pltpu.roll(h1, shift=(-k) % NP, axis=1)
        if not (dy == 0 and dx == 0):
            r = r * mask_ref[t:t + 1, :]                        # zero-pad border
        patch_ref[t * WPAD:(t + 1) * WPAD, :] = r               # bounded live range

    h2 = jnp.dot(w2_ref[...], patch_ref[...],
                 preferred_element_type=jnp.float32)            # (WPAD, NP)
    h2_ref[0:WPAD, :] = jnp.maximum(h2, 0.0) * g
    h2_ref[WPAD:2 * WPAD, :] = x_ref[INPLANES:INPLANES + WPAD, :]

    # ---- conv3 (1x1) + bn3 (folded) + identity residual + relu -----------------
    h3 = jnp.dot(w3_ref[...], h2_ref[...],
                 preferred_element_type=jnp.float32)            # (COUT, NP)
    o_ref[...] = jnp.maximum(h3 + x_ref[0:INPLANES, :], 0.0).astype(o_ref.dtype)


# ---- wrapper -----------------------------------------------------------------
def _fold_bn(weight, bias, mean, var):
    scale = weight / jnp.sqrt(var + EPS)
    shift = bias - mean * scale
    return scale.astype(jnp.float32), shift.astype(jnp.float32)


def _pad_rows(a, rows):
    return jnp.pad(a, ((0, rows - a.shape[0]),) + ((0, 0),) * (a.ndim - 1))


@jax.jit
def decay_bottleneck_forward(x_nchw, gammas, params):
    """params = (w1, bn1, w2, bn2, w3, bn3); conv weights in PyTorch OIHW layout,
    each bn = (weight, bias, running_mean, running_var)."""
    w1, bn1, w2, bn2, w3, bn3 = params
    s1, b1 = _fold_bn(*bn1)
    s2, b2 = _fold_bn(*bn2)
    s3, b3 = _fold_bn(*bn3)

    # Conv weights with BN scale folded; bottleneck width padded to WPAD; BN
    # shift appended as an extra 8-aligned "bias column" block.
    w1m = _pad_rows(w1.reshape(WIDTH, INPLANES) * s1[:, None], WPAD)            # (8,16)
    w1f = jnp.concatenate(
        [w1m, _pad_rows(b1, WPAD)[:, None], jnp.zeros((WPAD, WPAD - 1))],
        axis=1).astype(jnp.float32)                                             # (8,24)

    w2r = jnp.transpose(w2, (0, 2, 3, 1)) * s2[:, None, None, None]             # (O,ky,kx,I)
    w2m = jnp.pad(w2r, ((0, WPAD - WIDTH), (0, 0), (0, 0), (0, WPAD - WIDTH))
                  ).reshape(WPAD, 9 * WPAD)                                     # (8,72)
    w2f = jnp.concatenate(
        [w2m, _pad_rows(b2, WPAD)[:, None], jnp.zeros((WPAD, WPAD - 1))],
        axis=1).astype(jnp.float32)                                             # (8,80)

    w3m = jnp.pad(w3.reshape(COUT, WIDTH) * s3[:, None],
                  ((0, 0), (0, WPAD - WIDTH)))                                  # (16,8)
    w3f = jnp.concatenate(
        [w3m, b3[:, None], jnp.zeros((COUT, WPAD - 1))],
        axis=1).astype(jnp.float32)                                             # (16,16)

    # x: NCHW -> (C, N*P) with samples contiguous along lanes, plus the shared
    # ones/zeros bias block (rows 16..23) used by all three contractions.
    x_cnp = x_nchw.astype(jnp.float32).transpose(1, 0, 2, 3).reshape(INPLANES, NP)
    ones_blk = jnp.concatenate([jnp.ones((1, NP), jnp.float32),
                                jnp.zeros((WPAD - 1, NP), jnp.float32)], axis=0)
    x_aug = jnp.concatenate([x_cnp, ones_blk], axis=0)                          # (24, 512)

    # Per-sample decay factor broadcast to one value per lane.
    gam_lane = jnp.repeat(gammas[:, BLOCK_I].astype(jnp.float32), P).reshape(1, NP)

    # 3x3 zero-pad validity masks, one row per tap, from PER-SAMPLE coordinates
    # (lane % P) so lane rolls wrapping across the sample seam land only on
    # masked border lanes.
    p = jnp.arange(NP, dtype=jnp.int32) % P
    yy, xx = p // W, p % W
    rows = []
    for dy, dx in _TAPS:
        m = jnp.ones((NP,), bool)
        if dy == -1: m &= yy >= 1
        if dy == 1:  m &= yy <= H - 2
        if dx == -1: m &= xx >= 1
        if dx == 1:  m &= xx <= W - 2
        rows.append(m)
    mask = jnp.stack(rows).astype(jnp.float32)                                  # (9, 512)

    out_flat = pl.pallas_call(
        _bottleneck_kernel,
        out_shape=jax.ShapeDtypeStruct((COUT, NP), jnp.float32),
        in_specs=[pl.BlockSpec(memory_space=pltpu.MemorySpace.VMEM)] * 6,
        out_specs=pl.BlockSpec(memory_space=pltpu.MemorySpace.VMEM),
        scratch_shapes=[
            pltpu.VMEM((K2, NP), jnp.float32),   # conv2 patch (9 taps + bias block)
            pltpu.VMEM((K3, NP), jnp.float32),   # conv3 input (h2 + bias block)
        ],
    )(x_aug, w1f, w2f, w3f, mask, gam_lane)

    out = out_flat.reshape(COUT, N, H, W).transpose(1, 0, 2, 3)                 # NCHW
    return out, gammas                                           # matches (out, gammas)


# ---- pure-JAX reference (for correctness check) ------------------------------
def reference_forward(x_nchw, gammas, params):
    w1, bn1, w2, bn2, w3, bn3 = params
    s1, b1 = _fold_bn(*bn1)
    s2, b2 = _fold_bn(*bn2)
    s3, b3 = _fold_bn(*bn3)
    g = gammas[:, BLOCK_I].reshape(N, 1, 1, 1).astype(jnp.float32)
    x = x_nchw.astype(jnp.float32)
    dn = ('NCHW', 'OIHW', 'NCHW')

    def bn(h, s, b):
        return h * s.reshape(1, -1, 1, 1) + b.reshape(1, -1, 1, 1)

    h = lax.conv_general_dilated(x, w1, (1, 1), 'VALID', dimension_numbers=dn)
    h = jnp.maximum(bn(h, s1, b1), 0.0) * g
    h = lax.conv_general_dilated(h, w2, (1, 1), [(1, 1), (1, 1)], dimension_numbers=dn)
    h = jnp.maximum(bn(h, s2, b2), 0.0) * g
    h = lax.conv_general_dilated(h, w3, (1, 1), 'VALID', dimension_numbers=dn)
    out = jnp.maximum(bn(h, s3, b3) + x, 0.0)
    return out, gammas


# ---- deterministic parameter construction ------------------------------------
def make_params(key):
    ks = jax.random.split(key, 6)
    w1 = jax.random.normal(ks[0], (WIDTH, INPLANES, 1, 1), jnp.float32) * 0.1
    w2 = jax.random.normal(ks[1], (WIDTH, WIDTH, 3, 3), jnp.float32) * 0.1
    w3 = jax.random.normal(ks[2], (COUT, WIDTH, 1, 1), jnp.float32) * 0.1

    def bn(k, c):
        k1, k2, k3, k4 = jax.random.split(k, 4)
        weight = jax.random.uniform(k1, (c,), jnp.float32, 0.5, 1.5)
        bias = jax.random.normal(k2, (c,), jnp.float32) * 0.1
        mean = jax.random.normal(k3, (c,), jnp.float32) * 0.1
        var = jax.random.uniform(k4, (c,), jnp.float32, 0.5, 1.5)
        return (weight, bias, mean, var)

    return (w1, bn(ks[3], WIDTH), w2, bn(ks[4], WIDTH), w3, bn(ks[5], COUT))


if __name__ == "__main__":
    key = jax.random.PRNGKey(0)
    kx, kg, kp = jax.random.split(key, 3)

    x = jax.random.normal(kx, (N, INPLANES, H, W), jnp.float32)   # NCHW like PyTorch
    gammas = jax.random.uniform(kg, (N, NBLOCKS), jnp.float32)    # per-sample decay
    params = make_params(kp)

    out, gammas_out = decay_bottleneck_forward(x, gammas, params)
    out = jax.block_until_ready(out)

    ref, _ = reference_forward(x, gammas, params)
    ref = jax.block_until_ready(ref)

    assert out.shape == (N, COUT, H, W)
    err = float(jnp.max(jnp.abs(out - ref)))
    assert jnp.allclose(out, ref, atol=1e-4, rtol=1e-4), err
    print("KERNEL_OK")
</pallas_src>

<mosaic_0001>
module attributes {stable_mosaic.version = 11 : i64} {
  func.func @_bottleneck_kernel(%arg0: memref<24x512xf32, #tpu.memory_space<vmem>>, %arg1: memref<8x24xf32, #tpu.memory_space<vmem>>, %arg2: memref<8x80xf32, #tpu.memory_space<vmem>>, %arg3: memref<16x16xf32, #tpu.memory_space<vmem>>, %arg4: memref<9x512xf32, #tpu.memory_space<vmem>>, %arg5: memref<1x512xf32, #tpu.memory_space<vmem>>, %arg6: memref<16x512xf32, #tpu.memory_space<vmem>>, %arg7: memref<80x512xf32, #tpu.memory_space<vmem>>, %arg8: memref<16x512xf32, #tpu.memory_space<vmem>>) attributes {dimension_semantics = [], scalar_prefetch = 0 : i64, scratch_operands = 2 : i64, tpu.core_type = #tpu.core_type<tc>} {
    %c0 = arith.constant 0 : index
    %c0_0 = arith.constant 0 : index
    %0 = vector.load %arg5[%c0, %c0_0] : memref<1x512xf32, #tpu.memory_space<vmem>>, vector<1x512xf32>
    %c0_1 = arith.constant 0 : index
    %c0_2 = arith.constant 0 : index
    %1 = vector.load %arg1[%c0_1, %c0_2] : memref<8x24xf32, #tpu.memory_space<vmem>>, vector<8x24xf32>
    %c0_3 = arith.constant 0 : index
    %c0_4 = arith.constant 0 : index
    %2 = vector.load %arg0[%c0_3, %c0_4] : memref<24x512xf32, #tpu.memory_space<vmem>>, vector<24x512xf32>
    %cst = arith.constant dense<0.000000e+00> : vector<8x512xf32>
    %3 = tpu.matmul %1, %2, %cst {dimension_numbers = #tpu.dot_dimension_numbers<[1], [0], [0], [1], [0, 0, 1, 1], [], []>} : vector<8x24xf32>, vector<24x512xf32>, vector<8x512xf32> -> vector<8x512xf32>
    %cst_5 = arith.constant 0.000000e+00 : f32
    %4 = vector.broadcast %cst_5 : f32 to vector<8x512xf32>
    %5 = arith.maximumf %3, %4 : vector<8x512xf32>
    %6 = vector.broadcast %0 : vector<1x512xf32> to vector<8x512xf32>
    %7 = arith.mulf %5, %6 : vector<8x512xf32>
    %c16 = arith.constant 16 : index
    %c0_6 = arith.constant 0 : index
    %8 = vector.load %arg0[%c16, %c0_6] : memref<24x512xf32, #tpu.memory_space<vmem>>, vector<8x512xf32>
    %c72 = arith.constant 72 : index
    %c0_7 = arith.constant 0 : index
    %9 = vector.load %arg7[%c72, %c0_7] : memref<80x512xf32, #tpu.memory_space<vmem>>, vector<8x512xf32>
    tpu.vector_store %arg7[%c72, %c0_7], %8 {strides = array<i32>} : memref<80x512xf32, #tpu.memory_space<vmem>>, vector<8x512xf32>,
    %c17_i32 = arith.constant 17 : i32
    %10 = tpu.dynamic_rotate %7 by %c17_i32 dim 1 : vector<8x512xf32>, i32 -> vector<8x512xf32>
    %c0_8 = arith.constant 0 : index
    %c0_9 = arith.constant 0 : index
    %11 = vector.load %arg4[%c0_8, %c0_9] : memref<9x512xf32, #tpu.memory_space<vmem>>, vector<1x512xf32>
    %12 = vector.broadcast %11 : vector<1x512xf32> to vector<8x512xf32>
    %13 = arith.mulf %10, %12 : vector<8x512xf32>
    %c0_10 = arith.constant 0 : index
    %c0_11 = arith.constant 0 : index
    %14 = vector.load %arg7[%c0_10, %c0_11] : memref<80x512xf32, #tpu.memory_space<vmem>>, vector<8x512xf32>
    tpu.vector_store %arg7[%c0_10, %c0_11], %13 {strides = array<i32>} : memref<80x512xf32, #tpu.memory_space<vmem>>, vector<8x512xf32>,
    %c16_i32 = arith.constant 16 : i32
    %15 = tpu.dynamic_rotate %7 by %c16_i32 dim 1 : vector<8x512xf32>, i32 -> vector<8x512xf32>
    %c1 = arith.constant 1 : index
    %c0_12 = arith.constant 0 : index
    %16 = vector.load %arg4[%c1, %c0_12] : memref<9x512xf32, #tpu.memory_space<vmem>>, vector<1x512xf32>
    %17 = vector.broadcast %16 : vector<1x512xf32> to vector<8x512xf32>
    %18 = arith.mulf %15, %17 : vector<8x512xf32>
    %c8 = arith.constant 8 : index
    %c0_13 = arith.constant 0 : index
    %19 = vector.load %arg7[%c8, %c0_13] : memref<80x512xf32, #tpu.memory_space<vmem>>, vector<8x512xf32>
    tpu.vector_store %arg7[%c8, %c0_13], %18 {strides = array<i32>} : memref<80x512xf32, #tpu.memory_space<vmem>>, vector<8x512xf32>,
    %c15_i32 = arith.constant 15 : i32
    %20 = tpu.dynamic_rotate %7 by %c15_i32 dim 1 : vector<8x512xf32>, i32 -> vector<8x512xf32>
    %c2 = arith.constant 2 : index
    %c0_14 = arith.constant 0 : index
    %21 = vector.load %arg4[%c2, %c0_14] : memref<9x512xf32, #tpu.memory_space<vmem>>, vector<1x512xf32>
    %22 = vector.broadcast %21 : vector<1x512xf32> to vector<8x512xf32>
    %23 = arith.mulf %20, %22 : vector<8x512xf32>
    %c16_15 = arith.constant 16 : index
    %c0_16 = arith.constant 0 : index
    %24 = vector.load %arg7[%c16_15, %c0_16] : memref<80x512xf32, #tpu.memory_space<vmem>>, vector<8x512xf32>
    tpu.vector_store %arg7[%c16_15, %c0_16], %23 {strides = array<i32>} : memref<80x512xf32, #tpu.memory_space<vmem>>, vector<8x512xf32>,
    %c1_i32 = arith.constant 1 : i32
    %25 = tpu.dynamic_rotate %7 by %c1_i32 dim 1 : vector<8x512xf32>, i32 -> vector<8x512xf32>
    %c3 = arith.constant 3 : index
    %c0_17 = arith.constant 0 : index
    %26 = vector.load %arg4[%c3, %c0_17] : memref<9x512xf32, #tpu.memory_space<vmem>>, vector<1x512xf32>
    %27 = vector.broadcast %26 : vector<1x512xf32> to vector<8x512xf32>
    %28 = arith.mulf %25, %27 : vector<8x512xf32>
    %c24 = arith.constant 24 : index
    %c0_18 = arith.constant 0 : index
    %29 = vector.load %arg7[%c24, %c0_18] : memref<80x512xf32, #tpu.memory_space<vmem>>, vector<8x512xf32>
    tpu.vector_store %arg7[%c24, %c0_18], %28 {strides = array<i32>} : memref<80x512xf32, #tpu.memory_space<vmem>>, vector<8x512xf32>,
    %c32 = arith.constant 32 : index
    %c0_19 = arith.constant 0 : index
    %30 = vector.load %arg7[%c32, %c0_19] : memref<80x512xf32, #tpu.memory_space<vmem>>, vector<8x512xf32>
    tpu.vector_store %arg7[%c32, %c0_19], %7 {strides = array<i32>} : memref<80x512xf32, #tpu.memory_space<vmem>>, vector<8x512xf32>,
    %c511_i32 = arith.constant 511 : i32
    %31 = tpu.dynamic_rotate %7 by %c511_i32 dim 1 : vector<8x512xf32>, i32 -> vector<8x512xf32>
    %c5 = arith.constant 5 : index
    %c0_20 = arith.constant 0 : index
    %32 = vector.load %arg4[%c5, %c0_20] : memref<9x512xf32, #tpu.memory_space<vmem>>, vector<1x512xf32>
    %33 = vector.broadcast %32 : vector<1x512xf32> to vector<8x512xf32>
    %34 = arith.mulf %31, %33 : vector<8x512xf32>
    %c40 = arith.constant 40 : index
    %c0_21 = arith.constant 0 : index
    %35 = vector.load %arg7[%c40, %c0_21] : memref<80x512xf32, #tpu.memory_space<vmem>>, vector<8x512xf32>
    tpu.vector_store %arg7[%c40, %c0_21], %34 {strides = array<i32>} : memref<80x512xf32, #tpu.memory_space<vmem>>, vector<8x512xf32>,
    %c497_i32 = arith.constant 497 : i32
    %36 = tpu.dynamic_rotate %7 by %c497_i32 dim 1 : vector<8x512xf32>, i32 -> vector<8x512xf32>
    %c6 = arith.constant 6 : index
    %c0_22 = arith.constant 0 : index
    %37 = vector.load %arg4[%c6, %c0_22] : memref<9x512xf32, #tpu.memory_space<vmem>>, vector<1x512xf32>
    %38 = vector.broadcast %37 : vector<1x512xf32> to vector<8x512xf32>
    %39 = arith.mulf %36, %38 : vector<8x512xf32>
    %c48 = arith.constant 48 : index
    %c0_23 = arith.constant 0 : index
    %40 = vector.load %arg7[%c48, %c0_23] : memref<80x512xf32, #tpu.memory_space<vmem>>, vector<8x512xf32>
    tpu.vector_store %arg7[%c48, %c0_23], %39 {strides = array<i32>} : memref<80x512xf32, #tpu.memory_space<vmem>>, vector<8x512xf32>,
    %c496_i32 = arith.constant 496 : i32
    %41 = tpu.dynamic_rotate %7 by %c496_i32 dim 1 : vector<8x512xf32>, i32 -> vector<8x512xf32>
    %c7 = arith.constant 7 : index
    %c0_24 = arith.constant 0 : index
    %42 = vector.load %arg4[%c7, %c0_24] : memref<9x512xf32, #tpu.memory_space<vmem>>, vector<1x512xf32>
    %43 = vector.broadcast %42 : vector<1x512xf32> to vector<8x512xf32>
    %44 = arith.mulf %41, %43 : vector<8x512xf32>
    %c56 = arith.constant 56 : index
    %c0_25 = arith.constant 0 : index
    %45 = vector.load %arg7[%c56, %c0_25] : memref<80x512xf32, #tpu.memory_space<vmem>>, vector<8x512xf32>
    tpu.vector_store %arg7[%c56, %c0_25], %44 {strides = array<i32>} : memref<80x512xf32, #tpu.memory_space<vmem>>, vector<8x512xf32>,
    %c495_i32 = arith.constant 495 : i32
    %46 = tpu.dynamic_rotate %7 by %c495_i32 dim 1 : vector<8x512xf32>, i32 -> vector<8x512xf32>
    %c8_26 = arith.constant 8 : index
    %c0_27 = arith.constant 0 : index
    %47 = vector.load %arg4[%c8_26, %c0_27] : memref<9x512xf32, #tpu.memory_space<vmem>>, vector<1x512xf32>
    %48 = vector.broadcast %47 : vector<1x512xf32> to vector<8x512xf32>
    %49 = arith.mulf %46, %48 : vector<8x512xf32>
    %c64 = arith.constant 64 : index
    %c0_28 = arith.constant 0 : index
    %50 = vector.load %arg7[%c64, %c0_28] : memref<80x512xf32, #tpu.memory_space<vmem>>, vector<8x512xf32>
    tpu.vector_store %arg7[%c64, %c0_28], %49 {strides = array<i32>} : memref<80x512xf32, #tpu.memory_space<vmem>>, vector<8x512xf32>,
    %c0_29 = arith.constant 0 : index
    %c0_30 = arith.constant 0 : index
    %51 = vector.load %arg2[%c0_29, %c0_30] : memref<8x80xf32, #tpu.memory_space<vmem>>, vector<8x80xf32>
    %c0_31 = arith.constant 0 : index
    %c0_32 = arith.constant 0 : index
    %52 = vector.load %arg7[%c0_31, %c0_32] : memref<80x512xf32, #tpu.memory_space<vmem>>, vector<80x512xf32>
    %cst_33 = arith.constant dense<0.000000e+00> : vector<8x512xf32>
    %53 = tpu.matmul %51, %52, %cst_33 {dimension_numbers = #tpu.dot_dimension_numbers<[1], [0], [0], [1], [0, 0, 1, 1], [], []>} : vector<8x80xf32>, vector<80x512xf32>, vector<8x512xf32> -> vector<8x512xf32>
    %cst_34 = arith.constant 0.000000e+00 : f32
    %54 = vector.broadcast %cst_34 : f32 to vector<8x512xf32>
    %55 = arith.maximumf %53, %54 : vector<8x512xf32>
    %56 = vector.broadcast %0 : vector<1x512xf32> to vector<8x512xf32>
    %57 = arith.mulf %55, %56 : vector<8x512xf32>
    %c0_35 = arith.constant 0 : index
    %c0_36 = arith.constant 0 : index
    %58 = vector.load %arg8[%c0_35, %c0_36] : memref<16x512xf32, #tpu.memory_space<vmem>>, vector<8x512xf32>
    tpu.vector_store %arg8[%c0_35, %c0_36], %57 {strides = array<i32>} : memref<16x512xf32, #tpu.memory_space<vmem>>, vector<8x512xf32>,
    %c16_37 = arith.constant 16 : index
    %c0_38 = arith.constant 0 : index
    %59 = vector.load %arg0[%c16_37, %c0_38] : memref<24x512xf32, #tpu.memory_space<vmem>>, vector<8x512xf32>
    %c8_39 = arith.constant 8 : index
    %c0_40 = arith.constant 0 : index
    %60 = vector.load %arg8[%c8_39, %c0_40] : memref<16x512xf32, #tpu.memory_space<vmem>>, vector<8x512xf32>
    tpu.vector_store %arg8[%c8_39, %c0_40], %59 {strides = array<i32>} : memref<16x512xf32, #tpu.memory_space<vmem>>, vector<8x512xf32>,
    %c0_41 = arith.constant 0 : index
    %c0_42 = arith.constant 0 : index
    %61 = vector.load %arg3[%c0_41, %c0_42] : memref<16x16xf32, #tpu.memory_space<vmem>>, vector<16x16xf32>
    %c0_43 = arith.constant 0 : index
    %c0_44 = arith.constant 0 : index
    %62 = vector.load %arg8[%c0_43, %c0_44] : memref<16x512xf32, #tpu.memory_space<vmem>>, vector<16x512xf32>
    %cst_45 = arith.constant dense<0.000000e+00> : vector<16x512xf32>
    %63 = tpu.matmul %61, %62, %cst_45 {dimension_numbers = #tpu.dot_dimension_numbers<[1], [0], [0], [1], [0, 0, 1, 1], [], []>} : vector<16x16xf32>, vector<16x512xf32>, vector<16x512xf32> -> vector<16x512xf32>
    %c0_46 = arith.constant 0 : index
    %c0_47 = arith.constant 0 : index
    %64 = vector.load %arg0[%c0_46, %c0_47] : memref<24x512xf32, #tpu.memory_space<vmem>>, vector<16x512xf32>
    %65 = arith.addf %63, %64 : vector<16x512xf32>
    %cst_48 = arith.constant 0.000000e+00 : f32
    %66 = vector.broadcast %cst_48 : f32 to vector<16x512xf32>
    %67 = arith.maximumf %65, %66 : vector<16x512xf32>
    %c0_49 = arith.constant 0 : index
    %c0_50 = arith.constant 0 : index
    %68 = vector.load %arg6[%c0_49, %c0_50] : memref<16x512xf32, #tpu.memory_space<vmem>>, vector<16x512xf32>
    tpu.vector_store %arg6[%c0_49, %c0_50], %67 {strides = array<i32>} : memref<16x512xf32, #tpu.memory_space<vmem>>, vector<16x512xf32>,
    return
  }
}

</mosaic_0001>

<llo_original>
// kernel: decay_bottleneck_forward.1
$region0: #{decay_bottleneck_forward.1}
  #allocation0 [shape = 'u32[]', space=smem, size = 0x4, offset = 0x4, fixed_abs, tag = 'smem constant byte address 0x4 - core index']
  #allocation1 [shape = 'u32[144,128]{1,0:T(1,128)}', space=vmem, size = 0x12000, scoped, tag = 'internal scratch']
  #allocation2 [shape = 'f32[80,512]{1,0:T(8,128)}', space=vmem, size = 0x28000, scoped, tag = 'scratch operand']
  #allocation3 [shape = 'f32[16,512]{1,0:T(8,128)}', space=vmem, size = 0x8000, scoped, tag = 'scratch operand']
  %s0 = inlined_call_operand.vmem [shape: f32[24,512], index: 0, kind: input, shape index: {}]
  %s1 = inlined_call_operand.vmem [shape: f32[8,24], index: 1, kind: input, shape index: {}]
  %s2 = inlined_call_operand.vmem [shape: f32[8,80], index: 2, kind: input, shape index: {}]
  %s3 = inlined_call_operand.vmem [shape: f32[16,16], index: 3, kind: input, shape index: {}]
  %s4 = inlined_call_operand.vmem [shape: f32[9,512], index: 4, kind: input, shape index: {}]
  %s5 = inlined_call_operand.vmem [shape: f32[1,512], index: 5, kind: input, shape index: {}]
  %s6 = inlined_call_operand.vmem [shape: f32[16,512], index: 6, kind: output, shape index: {}]
  %s7 = sld [smem:[#allocation0]]
  $region34: #{decay_bottleneck_forward.1} parent=0
    _
  %s9 = ssub.s32 1, %s7
  %s10 = scalar_select 0, %s9, %s7
  // Predicated region
  $region2: #{decay_bottleneck_forward.1} parent=0 // pred_check
    _
  $region3: #{decay_bottleneck_forward.1} parent=0 // pred_check_branch
    %12 = sbr.rel (0) target = $region5
  $region4: #{decay_bottleneck_forward.1} parent=0 // pred_region
    _
  $region5: #{decay_bottleneck_forward.1} parent=0 // pred_fallthru
    _
  // Predicated region
  $region6: #{decay_bottleneck_forward.1} parent=0 // pred_check
    _
  $region7: #{decay_bottleneck_forward.1} parent=0 // pred_check_branch
    %14 = sbr.rel (0) target = $region9
  $region8: #{decay_bottleneck_forward.1} parent=0 // pred_region
    _
  $region9: #{decay_bottleneck_forward.1} parent=0 // pred_fallthru
    _
  // Predicated region
  $region10: #{decay_bottleneck_forward.1} parent=0 // pred_check
    _
  $region11: #{decay_bottleneck_forward.1} parent=0 // pred_check_branch
    %16 = sbr.rel (0) target = $region13
  $region12: #{decay_bottleneck_forward.1} parent=0 // pred_region
    _
  $region13: #{decay_bottleneck_forward.1} parent=0 // pred_fallthru
    _
  // Predicated region
  $region14: #{decay_bottleneck_forward.1} parent=0 // pred_check
    _
  $region15: #{decay_bottleneck_forward.1} parent=0 // pred_check_branch
    %18 = sbr.rel (0) target = $region17
  $region16: #{decay_bottleneck_forward.1} parent=0 // pred_region
    _
  $region17: #{decay_bottleneck_forward.1} parent=0 // pred_fallthru
    _
  // Predicated region
  $region18: #{decay_bottleneck_forward.1} parent=0 // pred_check
    _
  $region19: #{decay_bottleneck_forward.1} parent=0 // pred_check_branch
    %20 = sbr.rel (0) target = $region21
  $region20: #{decay_bottleneck_forward.1} parent=0 // pred_region
    _
  $region21: #{decay_bottleneck_forward.1} parent=0 // pred_fallthru
    _
  // Predicated region
  $region22: #{decay_bottleneck_forward.1} parent=0 // pred_check
    _
  $region23: #{decay_bottleneck_forward.1} parent=0 // pred_check_branch
    %22 = sbr.rel (0) target = $region25
  $region24: #{decay_bottleneck_forward.1} parent=0 // pred_region
    _
  $region25: #{decay_bottleneck_forward.1} parent=0 // pred_fallthru
    _
  %v23 = vld [vmem:[%s5] sm:$0xf]
  %v24 = vld [vmem:[%s1] sm:$0xff]
  %v25 = vld [vmem:[%s0] sm:$0xff]
  %v26 = vld [vmem:[%s0 + $0x8] sm:$0xff]
  %v27 = vld [vmem:[%s0 + $0x10] sm:$0xff]
  %v28 = vld [vmem:[%s0 + $0x18] sm:$0xff]
  %v29 = vld [vmem:[%s0 + $0x20] sm:$0xff]
  %v30 = vld [vmem:[%s0 + $0x28] sm:$0xff]
  %v31 = vld [vmem:[%s0 + $0x30] sm:$0xff]
  %v32 = vld [vmem:[%s0 + $0x38] sm:$0xff]
  %v33 = vld [vmem:[%s0 + $0x40] sm:$0xff]
  %v34 = vld [vmem:[%s0 + $0x48] sm:$0xff]
  %v35 = vld [vmem:[%s0 + $0x50] sm:$0xff]
  %v36 = vld [vmem:[%s0 + $0x58] sm:$0xff]
  %vm37 = vcmask 195584
  %v39 = vsel %vm37, %v24, 0
  %41 = vmatprep.subr.mxu0 %v26
  %42 = vmatpush1.msra.mxu0 %v25
  %43 = vmatprep.subr.mxu0 %v30
  %44 = vmatpush1.msra.mxu0 %v29
  %45 = vmatprep.subr.mxu0 %v34
  %46 = vmatpush1.msra.mxu0 %v33
  %47 = vmatprep.subr.mxu0 0.0
  %48 = vmatpush1.msra.mxu0 0.0
  %49 = vmatprep.subr.mxu0 0.0
  %50 = vmatpush1.msra.mxu0 0.0
  %51 = vmatprep.subr.mxu0 0.0
  %52 = vmatpush1.msra.mxu0 0.0
  %53 = vmatprep.subr.mxu0 0.0
  %54 = vmatpush1.msra.mxu0 0.0
  %55 = vmatprep.subr.mxu0 0.0
  %56 = vmatpush1.msra.mxu0 0.0
  %57 = vmatprep.subr.mxu0 0.0
  %58 = vmatpush1.msra.mxu0 0.0
  %59 = vmatprep.subr.mxu0 0.0
  %60 = vmatpush1.msra.mxu0 0.0
  %61 = vmatprep.subr.mxu0 0.0
  %62 = vmatpush1.msra.mxu0 0.0
  %63 = vmatprep.subr.mxu0 0.0
  %64 = vmatpush1.msra.mxu0 0.0
  %65 = vmatprep.subr.mxu0 0.0
  %66 = vmatpush1.msra.mxu0 0.0
  %67 = vmatprep.subr.mxu0 0.0
  %68 = vmatpush1.msra.mxu0 0.0
  %69 = vmatprep.subr.mxu0 0.0
  %70 = vmatpush1.msra.mxu0 0.0
  %71 = vmatprep.subr.mxu0 0.0
  %72 = vmatpush1.msra.mxu0 0.0
  %73 = vmatprep.subr.mxu0 0.0
  %74 = vmatpush1.msra.mxu0 0.0
  %75 = vmatprep.subr.mxu0 0.0
  %76 = vmatpush1.msra.mxu0 0.0
  %77 = vmatprep.subr.mxu0 0.0
  %78 = vmatpush1.msra.mxu0 0.0
  %79 = vmatprep.subr.mxu0 0.0
  %80 = vmatpush1.msra.mxu0 0.0
  %81 = vmatprep.subr.mxu0 0.0
  %82 = vmatpush1.msra.mxu0 0.0
  %83 = vmatprep.subr.mxu0 0.0
  %84 = vmatpush1.msra.mxu0 0.0
  %85 = vmatprep.subr.mxu0 0.0
  %86 = vmatpush1.msra.mxu0 0.0
  %87 = vmatprep.subr.mxu0 0.0
  %88 = vmatpush1.msra.mxu0 0.0
  %89 = vmatprep.subr.mxu0 0.0
  %90 = vmatpush1.msra.mxu0 0.0
  %91 = vmatprep.subr.mxu0 0.0
  %92 = vmatpush1.msra.mxu0 0.0
  %93 = vmatprep.subr.mxu0 0.0
  %94 = vmatpush1.msra.mxu0 0.0
  %95 = vmatprep.subr.mxu0 0.0
  %96 = vmatpush1.msra.mxu0 0.0
  %97 = vmatprep.subr.mxu0 0.0
  %98 = vmatpush1.msra.mxu0 0.0
  %99 = vmatprep.subr.mxu0 0.0
  %100 = vmatpush1.msra.mxu0 0.0
  %101 = vmatprep.subr.mxu0 0.0
  %102 = vmatpush1.msra.mxu0 0.0
  %103 = vmatprep.subr.mxu0 0.0
  %104 = vmatpush1.msra.mxu0 0.0
  %105 = vmatprep.mubr.f32.mxu0 0.0
  %106 = vmatmul.mubr.f32.gmra.mrb[0].mxu0 %v39
  %v107 = vpop.f32.mrb[0].mxu0
  %v108 = vadd.f32 0.0, %v107
  %v109 = vpop.f32.mrb[0].mxu0
  %v110 = vadd.f32 0.0, %v109
  %111 = vdwg.mxu0
  %112 = vmatprep.subr.mxu0 %v28
  %113 = vmatpush1.msra.mxu0 %v27
  %114 = vmatprep.subr.mxu0 %v32
  %115 = vmatpush1.msra.mxu0 %v31
  %116 = vmatprep.subr.mxu0 %v36
  %117 = vmatpush1.msra.mxu0 %v35
  %118 = vmatprep.subr.mxu0 0.0
  %119 = vmatpush1.msra.mxu0 0.0
  %120 = vmatprep.subr.mxu0 0.0
  %121 = vmatpush1.msra.mxu0 0.0
  %122 = vmatprep.subr.mxu0 0.0
  %123 = vmatpush1.msra.mxu0 0.0
  %124 = vmatprep.subr.mxu0 0.0
  %125 = vmatpush1.msra.mxu0 0.0
  %126 = vmatprep.subr.mxu0 0.0
  %127 = vmatpush1.msra.mxu0 0.0
  %128 = vmatprep.subr.mxu0 0.0
  %129 = vmatpush1.msra.mxu0 0.0
  %130 = vmatprep.subr.mxu0 0.0
  %131 = vmatpush1.msra.mxu0 0.0
  %132 = vmatprep.subr.mxu0 0.0
  %133 = vmatpush1.msra.mxu0 0.0
  %134 = vmatprep.subr.mxu0 0.0
  %135 = vmatpush1.msra.mxu0 0.0
  %136 = vmatprep.subr.mxu0 0.0
  %137 = vmatpush1.msra.mxu0 0.0
  %138 = vmatprep.subr.mxu0 0.0
  %139 = vmatpush1.msra.mxu0 0.0
  %140 = vmatprep.subr.mxu0 0.0
  %141 = vmatpush1.msra.mxu0 0.0
  %142 = vmatprep.subr.mxu0 0.0
  %143 = vmatpush1.msra.mxu0 0.0
  %144 = vmatprep.subr.mxu0 0.0
  %145 = vmatpush1.msra.mxu0 0.0
  %146 = vmatprep.subr.mxu0 0.0
  %147 = vmatpush1.msra.mxu0 0.0
  %148 = vmatprep.subr.mxu0 0.0
  %149 = vmatpush1.msra.mxu0 0.0
  %150 = vmatprep.subr.mxu0 0.0
  %151 = vmatpush1.msra.mxu0 0.0
  %152 = vmatprep.subr.mxu0 0.0
  %153 = vmatpush1.msra.mxu0 0.0
  %154 = vmatprep.subr.mxu0 0.0
  %155 = vmatpush1.msra.mxu0 0.0
  %156 = vmatprep.subr.mxu0 0.0
  %157 = vmatpush1.msra.mxu0 0.0
  %158 = vmatprep.subr.mxu0 0.0
  %159 = vmatpush1.msra.mxu0 0.0
  %160 = vmatprep.subr.mxu0 0.0
  %161 = vmatpush1.msra.mxu0 0.0
  %162 = vmatprep.subr.mxu0 0.0
  %163 = vmatpush1.msra.mxu0 0.0
  %164 = vmatprep.subr.mxu0 0.0
  %165 = vmatpush1.msra.mxu0 0.0
  %166 = vmatprep.subr.mxu0 0.0
  %167 = vmatpush1.msra.mxu0 0.0
  %168 = vmatprep.subr.mxu0 0.0
  %169 = vmatpush1.msra.mxu0 0.0
  %170 = vmatprep.subr.mxu0 0.0
  %171 = vmatpush1.msra.mxu0 0.0
  %172 = vmatprep.subr.mxu0 0.0
  %173 = vmatpush1.msra.mxu0 0.0
  %174 = vmatprep.subr.mxu0 0.0
  %175 = vmatpush1.msra.mxu0 0.0
  %176 = vmatprep.mubr.f32.mxu0 0.0
  %177 = vmatmul.mubr.f32.gmra.mrb[0].mxu0 %v39
  %v178 = vpop.f32.mrb[0].mxu0
  %v179 = vadd.f32 0.0, %v178
  %v180 = vpop.f32.mrb[0].mxu0
  %v181 = vadd.f32 0.0, %v180
  %182 = vdwg.mxu0
  %v183 = vmax.f32 %v108, 0.0
  %v184 = vmax.f32 %v110, 0.0
  %v185 = vmax.f32 %v179, 0.0
  %v186 = vmax.f32 %v181, 0.0
  %v188 = vlaneseq
  %v189 = vshrl.u32 %v188, 7
  %v190 = vsub.s32 0, %v189
  %v191 = vrot.slane %v23, %v190
  %v192 = vlaneseq
  %v193 = vshrl.u32 %v192, 7
  %v194 = vsub.s32 1, %v193
  %v195 = vrot.slane %v23, %v194
  %v196 = vlaneseq
  %v197 = vshrl.u32 %v196, 7
  %v198 = vsub.s32 2, %v197
  %v199 = vrot.slane %v23, %v198
  %v200 = vlaneseq
  %v201 = vshrl.u32 %v200, 7
  %v202 = vsub.s32 3, %v201
  %v203 = vrot.slane %v23, %v202
  %v208 = vmul.f32 %v183, %v191
  %v209 = vmul.f32 %v184, %v195
  %v210 = vmul.f32 %v185, %v199
  %v211 = vmul.f32 %v186, %v203
  %212 = vst [vmem:[#allocation2 + $0x120] sm:$0xff] %v33
  %213 = vst [vmem:[#allocation2 + $0x128] sm:$0xff] %v34
  %214 = vst [vmem:[#allocation2 + $0x130] sm:$0xff] %v35
  %215 = vst [vmem:[#allocation2 + $0x138] sm:$0xff] %v36
  %216 = vrot.lane.b32.xlu0 %v208, 17
  %v217 = vpop.permute.xlu0 %216
  %218 = vrot.lane.b32.xlu0 %v209, 17
  %v219 = vpop.permute.xlu0 %218
  %220 = vrot.lane.b32.xlu0 %v210, 17
  %v221 = vpop.permute.xlu0 %220
  %222 = vrot.lane.b32.xlu0 %v211, 17
  %v223 = vpop.permute.xlu0 %222
  %v224 = vlaneseq
  %v225 = vand.u32 %v224, 127
  %vm226 = vcmp.lt.s32.totalorder %v225, 17
  %v227 = vsel %vm226, %v221, %v223
  %v228 = vsel %vm226, %v219, %v221
  %v229 = vsel %vm226, %v217, %v219
  %v230 = vsel %vm226, %v223, %v217
  %v231 = vld [vmem:[%s4] ss:$8 sm:$0xf]
  %v233 = vlaneseq
  %v234 = vshrl.u32 %v233, 7
  %v235 = vsub.s32 0, %v234
  %v236 = vrot.slane %v231, %v235
  %v237 = vlaneseq
  %v238 = vshrl.u32 %v237, 7
  %v239 = vsub.s32 1, %v238
  %v240 = vrot.slane %v231, %v239
  %v241 = vlaneseq
  %v242 = vshrl.u32 %v241, 7
  %v243 = vsub.s32 2, %v242
  %v244 = vrot.slane %v231, %v243
  %v245 = vlaneseq
  %v246 = vshrl.u32 %v245, 7
  %v247 = vsub.s32 3, %v246
  %v248 = vrot.slane %v231, %v247
  %v253 = vmul.f32 %v230, %v236
  %v254 = vmul.f32 %v229, %v240
  %v255 = vmul.f32 %v228, %v244
  %v256 = vmul.f32 %v227, %v248
  %257 = vst [vmem:[#allocation2] sm:$0xff] %v253
  %258 = vst [vmem:[#allocation2 + $0x8] sm:$0xff] %v254
  %259 = vst [vmem:[#allocation2 + $0x10] sm:$0xff] %v255
  %260 = vst [vmem:[#allocation2 + $0x18] sm:$0xff] %v256
  %261 = vrot.lane.b32.xlu0 %v208, 16
  %v262 = vpop.permute.xlu0 %261
  %263 = vrot.lane.b32.xlu0 %v209, 16
  %v264 = vpop.permute.xlu0 %263
  %265 = vrot.lane.b32.xlu0 %v210, 16
  %v266 = vpop.permute.xlu0 %265
  %267 = vrot.lane.b32.xlu0 %v211, 16
  %v268 = vpop.permute.xlu0 %267
  %vm269 = vcmp.lt.s32.totalorder %v225, 16
  %v270 = vsel %vm269, %v266, %v268
  %v271 = vsel %vm269, %v264, %v266
  %v272 = vsel %vm269, %v262, %v264
  %v273 = vsel %vm269, %v268, %v262
  %s274 = scalar_lea.vmem %s4, 1
  %v275 = vld [vmem:[%s274] ss:$8 sm:$0xf]
  %v277 = vlaneseq
  %v278 = vshrl.u32 %v277, 7
  %v279 = vsub.s32 0, %v278
  %v280 = vrot.slane %v275, %v279
  %v281 = vlaneseq
  %v282 = vshrl.u32 %v281, 7
  %v283 = vsub.s32 1, %v282
  %v284 = vrot.slane %v275, %v283
  %v285 = vlaneseq
  %v286 = vshrl.u32 %v285, 7
  %v287 = vsub.s32 2, %v286
  %v288 = vrot.slane %v275, %v287
  %v289 = vlaneseq
  %v290 = vshrl.u32 %v289, 7
  %v291 = vsub.s32 3, %v290
  %v292 = vrot.slane %v275, %v291
  %v297 = vmul.f32 %v273, %v280
  %v298 = vmul.f32 %v272, %v284
  %v299 = vmul.f32 %v271, %v288
  %v300 = vmul.f32 %v270, %v292
  %301 = vst [vmem:[#allocation2 + $0x20] sm:$0xff] %v297
  %302 = vst [vmem:[#allocation2 + $0x28] sm:$0xff] %v298
  %303 = vst [vmem:[#allocation2 + $0x30] sm:$0xff] %v299
  %304 = vst [vmem:[#allocation2 + $0x38] sm:$0xff] %v300
  %305 = vrot.lane.b32.xlu0 %v208, 15
  %v306 = vpop.permute.xlu0 %305
  %307 = vrot.lane.b32.xlu0 %v209, 15
  %v308 = vpop.permute.xlu0 %307
  %309 = vrot.lane.b32.xlu0 %v210, 15
  %v310 = vpop.permute.xlu0 %309
  %311 = vrot.lane.b32.xlu0 %v211, 15
  %v312 = vpop.permute.xlu0 %311
  %vm313 = vcmp.lt.s32.totalorder %v225, 15
  %v314 = vsel %vm313, %v310, %v312
  %v315 = vsel %vm313, %v308, %v310
  %v316 = vsel %vm313, %v306, %v308
  %v317 = vsel %vm313, %v312, %v306
  %s318 = scalar_lea.vmem %s4, 2
  %v319 = vld [vmem:[%s318] ss:$8 sm:$0xf]
  %v321 = vlaneseq
  %v322 = vshrl.u32 %v321, 7
  %v323 = vsub.s32 0, %v322
  %v324 = vrot.slane %v319, %v323
  %v325 = vlaneseq
  %v326 = vshrl.u32 %v325, 7
  %v327 = vsub.s32 1, %v326
  %v328 = vrot.slane %v319, %v327
  %v329 = vlaneseq
  %v330 = vshrl.u32 %v329, 7
  %v331 = vsub.s32 2, %v330
  %v332 = vrot.slane %v319, %v331
  %v333 = vlaneseq
  %v334 = vshrl.u32 %v333, 7
  %v335 = vsub.s32 3, %v334
  %v336 = vrot.slane %v319, %v335
  %v341 = vmul.f32 %v317, %v324
  %v342 = vmul.f32 %v316, %v328
  %v343 = vmul.f32 %v315, %v332
  %v344 = vmul.f32 %v314, %v336
  %345 = vst [vmem:[#allocation2 + $0x40] sm:$0xff] %v341
  %346 = vst [vmem:[#allocation2 + $0x48] sm:$0xff] %v342
  %347 = vst [vmem:[#allocation2 + $0x50] sm:$0xff] %v343
  %348 = vst [vmem:[#allocation2 + $0x58] sm:$0xff] %v344
  %349 = vrot.lane.b32.xlu0 %v208, 1
  %v350 = vpop.permute.xlu0 %349
  %351 = vrot.lane.b32.xlu0 %v209, 1
  %v352 = vpop.permute.xlu0 %351
  %353 = vrot.lane.b32.xlu0 %v210, 1
  %v354 = vpop.permute.xlu0 %353
  %355 = vrot.lane.b32.xlu0 %v211, 1
  %v356 = vpop.permute.xlu0 %355
  %vm357 = vcmp.lt.s32.totalorder %v225, 1
  %v358 = vsel %vm357, %v354, %v356
  %v359 = vsel %vm357, %v352, %v354
  %v360 = vsel %vm357, %v350, %v352
  %v361 = vsel %vm357, %v356, %v350
  %s362 = scalar_lea.vmem %s4, 3
  %v363 = vld [vmem:[%s362] ss:$8 sm:$0xf]
  %v365 = vlaneseq
  %v366 = vshrl.u32 %v365, 7
  %v367 = vsub.s32 0, %v366
  %v368 = vrot.slane %v363, %v367
  %v369 = vlaneseq
  %v370 = vshrl.u32 %v369, 7
  %v371 = vsub.s32 1, %v370
  %v372 = vrot.slane %v363, %v371
  %v373 = vlaneseq
  %v374 = vshrl.u32 %v373, 7
  %v375 = vsub.s32 2, %v374
  %v376 = vrot.slane %v363, %v375
  %v377 = vlaneseq
  %v378 = vshrl.u32 %v377, 7
  %v379 = vsub.s32 3, %v378
  %v380 = vrot.slane %v363, %v379
  %v385 = vmul.f32 %v361, %v368
  %v386 = vmul.f32 %v360, %v372
  %v387 = vmul.f32 %v359, %v376
  %v388 = vmul.f32 %v358, %v380
  %389 = vst [vmem:[#allocation2 + $0x60] sm:$0xff] %v385
  %390 = vst [vmem:[#allocation2 + $0x68] sm:$0xff] %v386
  %391 = vst [vmem:[#allocation2 + $0x70] sm:$0xff] %v387
  %392 = vst [vmem:[#allocation2 + $0x78] sm:$0xff] %v388
  %393 = vst [vmem:[#allocation2 + $0x80] sm:$0xff] %v208
  %394 = vst [vmem:[#allocation2 + $0x88] sm:$0xff] %v209
  %395 = vst [vmem:[#allocation2 + $0x90] sm:$0xff] %v210
  %396 = vst [vmem:[#allocation2 + $0x98] sm:$0xff] %v211
  %397 = vrot.lane.b32.xlu0 %v208, 127
  %v398 = vpop.permute.xlu0 %397
  %399 = vrot.lane.b32.xlu0 %v209, 127
  %v400 = vpop.permute.xlu0 %399
  %401 = vrot.lane.b32.xlu0 %v210, 127
  %v402 = vpop.permute.xlu0 %401
  %403 = vrot.lane.b32.xlu0 %v211, 127
  %v404 = vpop.permute.xlu0 %403
  %vm405 = vcmp.lt.s32.totalorder %v225, 127
  %v406 = vsel %vm405, %v402, %v404
  %v407 = vsel %vm405, %v400, %v402
  %v408 = vsel %vm405, %v398, %v400
  %v409 = vsel %vm405, %v404, %v398
  %s410 = scalar_lea.vmem %s4, 5
  %v411 = vld [vmem:[%s410] ss:$8 sm:$0xf]
  %v413 = vlaneseq
  %v414 = vshrl.u32 %v413, 7
  %v415 = vsub.s32 0, %v414
  %v416 = vrot.slane %v411, %v415
  %v417 = vlaneseq
  %v418 = vshrl.u32 %v417, 7
  %v419 = vsub.s32 1, %v418
  %v420 = vrot.slane %v411, %v419
  %v421 = vlaneseq
  %v422 = vshrl.u32 %v421, 7
  %v423 = vsub.s32 2, %v422
  %v424 = vrot.slane %v411, %v423
  %v425 = vlaneseq
  %v426 = vshrl.u32 %v425, 7
  %v427 = vsub.s32 3, %v426
  %v428 = vrot.slane %v411, %v427
  %v433 = vmul.f32 %v408, %v416
  %v434 = vmul.f32 %v407, %v420
  %v435 = vmul.f32 %v406, %v424
  %v436 = vmul.f32 %v409, %v428
  %437 = vst [vmem:[#allocation2 + $0xa0] sm:$0xff] %v433
  %438 = vst [vmem:[#allocation2 + $0xa8] sm:$0xff] %v434
  %439 = vst [vmem:[#allocation2 + $0xb0] sm:$0xff] %v435
  %440 = vst [vmem:[#allocation2 + $0xb8] sm:$0xff] %v436
  %441 = vrot.lane.b32.xlu0 %v208, 113
  %v442 = vpop.permute.xlu0 %441
  %443 = vrot.lane.b32.xlu0 %v209, 113
  %v444 = vpop.permute.xlu0 %443
  %445 = vrot.lane.b32.xlu0 %v210, 113
  %v446 = vpop.permute.xlu0 %445
  %447 = vrot.lane.b32.xlu0 %v211, 113
  %v448 = vpop.permute.xlu0 %447
  %vm449 = vcmp.lt.s32.totalorder %v225, 113
  %v450 = vsel %vm449, %v446, %v448
  %v451 = vsel %vm449, %v444, %v446
  %v452 = vsel %vm449, %v442, %v444
  %v453 = vsel %vm449, %v448, %v442
  %s454 = scalar_lea.vmem %s4, 6
  %v455 = vld [vmem:[%s454] ss:$8 sm:$0xf]
  %v457 = vlaneseq
  %v458 = vshrl.u32 %v457, 7
  %v459 = vsub.s32 0, %v458
  %v460 = vrot.slane %v455, %v459
  %v461 = vlaneseq
  %v462 = vshrl.u32 %v461, 7
  %v463 = vsub.s32 1, %v462
  %v464 = vrot.slane %v455, %v463
  %v465 = vlaneseq
  %v466 = vshrl.u32 %v465, 7
  %v467 = vsub.s32 2, %v466
  %v468 = vrot.slane %v455, %v467
  %v469 = vlaneseq
  %v470 = vshrl.u32 %v469, 7
  %v471 = vsub.s32 3, %v470
  %v472 = vrot.slane %v455, %v471
  %v477 = vmul.f32 %v452, %v460
  %v478 = vmul.f32 %v451, %v464
  %v479 = vmul.f32 %v450, %v468
  %v480 = vmul.f32 %v453, %v472
  %481 = vst [vmem:[#allocation2 + $0xc0] sm:$0xff] %v477
  %482 = vst [vmem:[#allocation2 + $0xc8] sm:$0xff] %v478
  %483 = vst [vmem:[#allocation2 + $0xd0] sm:$0xff] %v479
  %484 = vst [vmem:[#allocation2 + $0xd8] sm:$0xff] %v480
  %485 = vrot.lane.b32.xlu0 %v208, 112
  %v486 = vpop.permute.xlu0 %485
  %487 = vrot.lane.b32.xlu0 %v209, 112
  %v488 = vpop.permute.xlu0 %487
  %489 = vrot.lane.b32.xlu0 %v210, 112
  %v490 = vpop.permute.xlu0 %489
  %491 = vrot.lane.b32.xlu0 %v211, 112
  %v492 = vpop.permute.xlu0 %491
  %vm493 = vcmp.lt.s32.totalorder %v225, 112
  %v494 = vsel %vm493, %v490, %v492
  %v495 = vsel %vm493, %v488, %v490
  %v496 = vsel %vm493, %v486, %v488
  %v497 = vsel %vm493, %v492, %v486
  %s498 = scalar_lea.vmem %s4, 7
  %v499 = vld [vmem:[%s498] ss:$8 sm:$0xf]
  %v501 = vlaneseq
  %v502 = vshrl.u32 %v501, 7
  %v503 = vsub.s32 0, %v502
  %v504 = vrot.slane %v499, %v503
  %v505 = vlaneseq
  %v506 = vshrl.u32 %v505, 7
  %v507 = vsub.s32 1, %v506
  %v508 = vrot.slane %v499, %v507
  %v509 = vlaneseq
  %v510 = vshrl.u32 %v509, 7
  %v511 = vsub.s32 2, %v510
  %v512 = vrot.slane %v499, %v511
  %v513 = vlaneseq
  %v514 = vshrl.u32 %v513, 7
  %v515 = vsub.s32 3, %v514
  %v516 = vrot.slane %v499, %v515
  %v521 = vmul.f32 %v496, %v504
  %v522 = vmul.f32 %v495, %v508
  %v523 = vmul.f32 %v494, %v512
  %v524 = vmul.f32 %v497, %v516
  %525 = vst [vmem:[#allocation2 + $0xe0] sm:$0xff] %v521
  %526 = vst [vmem:[#allocation2 + $0xe8] sm:$0xff] %v522
  %527 = vst [vmem:[#allocation2 + $0xf0] sm:$0xff] %v523
  %528 = vst [vmem:[#allocation2 + $0xf8] sm:$0xff] %v524
  %529 = vrot.lane.b32.xlu0 %v208, 111
  %v530 = vpop.permute.xlu0 %529
  %531 = vrot.lane.b32.xlu0 %v209, 111
  %v532 = vpop.permute.xlu0 %531
  %533 = vrot.lane.b32.xlu0 %v210, 111
  %v534 = vpop.permute.xlu0 %533
  %535 = vrot.lane.b32.xlu0 %v211, 111
  %v536 = vpop.permute.xlu0 %535
  %vm537 = vcmp.lt.s32.totalorder %v225, 111
  %v538 = vsel %vm537, %v534, %v536
  %v539 = vsel %vm537, %v532, %v534
  %v540 = vsel %vm537, %v530, %v532
  %v541 = vsel %vm537, %v536, %v530
  %s542 = scalar_lea.vmem %s4, 32
  %v543 = vld [vmem:[%s542] ss:$8 sm:$0xf]
  %v545 = vlaneseq
  %v546 = vshrl.u32 %v545, 7
  %v547 = vsub.s32 0, %v546
  %v548 = vrot.slane %v543, %v547
  %v549 = vlaneseq
  %v550 = vshrl.u32 %v549, 7
  %v551 = vsub.s32 1, %v550
  %v552 = vrot.slane %v543, %v551
  %v553 = vlaneseq
  %v554 = vshrl.u32 %v553, 7
  %v555 = vsub.s32 2, %v554
  %v556 = vrot.slane %v543, %v555
  %v557 = vlaneseq
  %v558 = vshrl.u32 %v557, 7
  %v559 = vsub.s32 3, %v558
  %v560 = vrot.slane %v543, %v559
  %v565 = vmul.f32 %v540, %v548
  %v566 = vmul.f32 %v539, %v552
  %v567 = vmul.f32 %v538, %v556
  %v568 = vmul.f32 %v541, %v560
  %569 = vst [vmem:[#allocation2 + $0x100] sm:$0xff] %v565
  %570 = vst [vmem:[#allocation2 + $0x108] sm:$0xff] %v566
  %571 = vst [vmem:[#allocation2 + $0x110] sm:$0xff] %v567
  %572 = vst [vmem:[#allocation2 + $0x118] sm:$0xff] %v568
  %v573 = vld [vmem:[%s2] sm:$0xff]
  %v574 = vld [vmem:[#allocation2] sm:$0xff]
  %v575 = vld [vmem:[#allocation2 + $0x8] sm:$0xff]
  %v576 = vld [vmem:[#allocation2 + $0x10] sm:$0xff]
  %v577 = vld [vmem:[#allocation2 + $0x18] sm:$0xff]
  %v578 = vld [vmem:[#allocation2 + $0x20] sm:$0xff]
  %v579 = vld [vmem:[#allocation2 + $0x28] sm:$0xff]
  %v580 = vld [vmem:[#allocation2 + $0x30] sm:$0xff]
  %v581 = vld [vmem:[#allocation2 + $0x38] sm:$0xff]
  %v582 = vld [vmem:[#allocation2 + $0x40] sm:$0xff]
  %v583 = vld [vmem:[#allocation2 + $0x48] sm:$0xff]
  %v584 = vld [vmem:[#allocation2 + $0x50] sm:$0xff]
  %v585 = vld [vmem:[#allocation2 + $0x58] sm:$0xff]
  %v586 = vld [vmem:[#allocation2 + $0x60] sm:$0xff]
  %v587 = vld [vmem:[#allocation2 + $0x68] sm:$0xff]
  %v588 = vld [vmem:[#allocation2 + $0x70] sm:$0xff]
  %v589 = vld [vmem:[#allocation2 + $0x78] sm:$0xff]
  %v590 = vld [vmem:[#allocation2 + $0x80] sm:$0xff]
  %v591 = vld [vmem:[#allocation2 + $0x88] sm:$0xff]
  %v592 = vld [vmem:[#allocation2 + $0x90] sm:$0xff]
  %v593 = vld [vmem:[#allocation2 + $0x98] sm:$0xff]
  %v594 = vld [vmem:[#allocation2 + $0xa0] sm:$0xff]
  %v595 = vld [vmem:[#allocation2 + $0xa8] sm:$0xff]
  %v596 = vld [vmem:[#allocation2 + $0xb0] sm:$0xff]
  %v597 = vld [vmem:[#allocation2 + $0xb8] sm:$0xff]
  %v598 = vld [vmem:[#allocation2 + $0xc0] sm:$0xff]
  %v599 = vld [vmem:[#allocation2 + $0xc8] sm:$0xff]
  %v600 = vld [vmem:[#allocation2 + $0xd0] sm:$0xff]
  %v601 = vld [vmem:[#allocation2 + $0xd8] sm:$0xff]
  %v602 = vld [vmem:[#allocation2 + $0xe0] sm:$0xff]
  %v603 = vld [vmem:[#allocation2 + $0xe8] sm:$0xff]
  %v604 = vld [vmem:[#allocation2 + $0xf0] sm:$0xff]
  %v605 = vld [vmem:[#allocation2 + $0xf8] sm:$0xff]
  %v606 = vld [vmem:[#allocation2 + $0x100] sm:$0xff]
  %v607 = vld [vmem:[#allocation2 + $0x108] sm:$0xff]
  %v608 = vld [vmem:[#allocation2 + $0x110] sm:$0xff]
  %v609 = vld [vmem:[#allocation2 + $0x118] sm:$0xff]
  %v610 = vld [vmem:[#allocation2 + $0x120] sm:$0xff]
  %v611 = vld [vmem:[#allocation2 + $0x128] sm:$0xff]
  %v612 = vld [vmem:[#allocation2 + $0x130] sm:$0xff]
  %v613 = vld [vmem:[#allocation2 + $0x138] sm:$0xff]
  %vm614 = vcmask 654336
  %v616 = vsel %vm614, %v573, 0
  %618 = vmatprep.subr.mxu0 %v575
  %619 = vmatpush1.msra.mxu0 %v574
  %620 = vmatprep.subr.mxu0 %v579
  %621 = vmatpush1.msra.mxu0 %v578
  %622 = vmatprep.subr.mxu0 %v583
  %623 = vmatpush1.msra.mxu0 %v582
  %624 = vmatprep.subr.mxu0 %v587
  %625 = vmatpush1.msra.mxu0 %v586
  %626 = vmatprep.subr.mxu0 %v591
  %627 = vmatpush1.msra.mxu0 %v590
  %628 = vmatprep.subr.mxu0 %v595
  %629 = vmatpush1.msra.mxu0 %v594
  %630 = vmatprep.subr.mxu0 %v599
  %631 = vmatpush1.msra.mxu0 %v598
  %632 = vmatprep.subr.mxu0 %v603
  %633 = vmatpush1.msra.mxu0 %v602
  %634 = vmatprep.subr.mxu0 %v607
  %635 = vmatpush1.msra.mxu0 %v606
  %636 = vmatprep.subr.mxu0 %v611
  %637 = vmatpush1.msra.mxu0 %v610
  %638 = vmatprep.subr.mxu0 0.0
  %639 = vmatpush1.msra.mxu0 0.0
  %640 = vmatprep.subr.mxu0 0.0
  %641 = vmatpush1.msra.mxu0 0.0
  %642 = vmatprep.subr.mxu0 0.0
  %643 = vmatpush1.msra.mxu0 0.0
  %644 = vmatprep.subr.mxu0 0.0
  %645 = vmatpush1.msra.mxu0 0.0
  %646 = vmatprep.subr.mxu0 0.0
  %647 = vmatpush1.msra.mxu0 0.0
  %648 = vmatprep.subr.mxu0 0.0
  %649 = vmatpush1.msra.mxu0 0.0
  %650 = vmatprep.subr.mxu0 0.0
  %651 = vmatpush1.msra.mxu0 0.0
  %652 = vmatprep.subr.mxu0 0.0
  %653 = vmatpush1.msra.mxu0 0.0
  %654 = vmatprep.subr.mxu0 0.0
  %655 = vmatpush1.msra.mxu0 0.0
  %656 = vmatprep.subr.mxu0 0.0
  %657 = vmatpush1.msra.mxu0 0.0
  %658 = vmatprep.subr.mxu0 0.0
  %659 = vmatpush1.msra.mxu0 0.0
  %660 = vmatprep.subr.mxu0 0.0
  %661 = vmatpush1.msra.mxu0 0.0
  %662 = vmatprep.subr.mxu0 0.0
  %663 = vmatpush1.msra.mxu0 0.0
  %664 = vmatprep.subr.mxu0 0.0
  %665 = vmatpush1.msra.mxu0 0.0
  %666 = vmatprep.subr.mxu0 0.0
  %667 = vmatpush1.msra.mxu0 0.0
  %668 = vmatprep.subr.mxu0 0.0
  %669 = vmatpush1.msra.mxu0 0.0
  %670 = vmatprep.subr.mxu0 0.0
  %671 = vmatpush1.msra.mxu0 0.0
  %672 = vmatprep.subr.mxu0 0.0
  %673 = vmatpush1.msra.mxu0 0.0
  %674 = vmatprep.subr.mxu0 0.0
  %675 = vmatpush1.msra.mxu0 0.0
  %676 = vmatprep.subr.mxu0 0.0
  %677 = vmatpush1.msra.mxu0 0.0
  %678 = vmatprep.subr.mxu0 0.0
  %679 = vmatpush1.msra.mxu0 0.0
  %680 = vmatprep.subr.mxu0 0.0
  %681 = vmatpush1.msra.mxu0 0.0
  %682 = vmatprep.mubr.f32.mxu0 0.0
  %683 = vmatmul.mubr.f32.gmra.mrb[0].mxu0 %v616
  %v684 = vpop.f32.mrb[0].mxu0
  %v685 = vadd.f32 0.0, %v684
  %v686 = vpop.f32.mrb[0].mxu0
  %v687 = vadd.f32 0.0, %v686
  %688 = vdwg.mxu0
  %689 = vmatprep.subr.mxu0 %v577
  %690 = vmatpush1.msra.mxu0 %v576
  %691 = vmatprep.subr.mxu0 %v581
  %692 = vmatpush1.msra.mxu0 %v580
  %693 = vmatprep.subr.mxu0 %v585
  %694 = vmatpush1.msra.mxu0 %v584
  %695 = vmatprep.subr.mxu0 %v589
  %696 = vmatpush1.msra.mxu0 %v588
  %697 = vmatprep.subr.mxu0 %v593
  %698 = vmatpush1.msra.mxu0 %v592
  %699 = vmatprep.subr.mxu0 %v597
  %700 = vmatpush1.msra.mxu0 %v596
  %701 = vmatprep.subr.mxu0 %v601
  %702 = vmatpush1.msra.mxu0 %v600
  %703 = vmatprep.subr.mxu0 %v605
  %704 = vmatpush1.msra.mxu0 %v604
  %705 = vmatprep.subr.mxu0 %v609
  %706 = vmatpush1.msra.mxu0 %v608
  %707 = vmatprep.subr.mxu0 %v613
  %708 = vmatpush1.msra.mxu0 %v612
  %709 = vmatprep.subr.mxu0 0.0
  %710 = vmatpush1.msra.mxu0 0.0
  %711 = vmatprep.subr.mxu0 0.0
  %712 = vmatpush1.msra.mxu0 0.0
  %713 = vmatprep.subr.mxu0 0.0
  %714 = vmatpush1.msra.mxu0 0.0
  %715 = vmatprep.subr.mxu0 0.0
  %716 = vmatpush1.msra.mxu0 0.0
  %717 = vmatprep.subr.mxu0 0.0
  %718 = vmatpush1.msra.mxu0 0.0
  %719 = vmatprep.subr.mxu0 0.0
  %720 = vmatpush1.msra.mxu0 0.0
  %721 = vmatprep.subr.mxu0 0.0
  %722 = vmatpush1.msra.mxu0 0.0
  %723 = vmatprep.subr.mxu0 0.0
  %724 = vmatpush1.msra.mxu0 0.0
  %725 = vmatprep.subr.mxu0 0.0
  %726 = vmatpush1.msra.mxu0 0.0
  %727 = vmatprep.subr.mxu0 0.0
  %728 = vmatpush1.msra.mxu0 0.0
  %729 = vmatprep.subr.mxu0 0.0
  %730 = vmatpush1.msra.mxu0 0.0
  %731 = vmatprep.subr.mxu0 0.0
  %732 = vmatpush1.msra.mxu0 0.0
  %733 = vmatprep.subr.mxu0 0.0
  %734 = vmatpush1.msra.mxu0 0.0
  %735 = vmatprep.subr.mxu0 0.0
  %736 = vmatpush1.msra.mxu0 0.0
  %737 = vmatprep.subr.mxu0 0.0
  %738 = vmatpush1.msra.mxu0 0.0
  %739 = vmatprep.subr.mxu0 0.0
  %740 = vmatpush1.msra.mxu0 0.0
  %741 = vmatprep.subr.mxu0 0.0
  %742 = vmatpush1.msra.mxu0 0.0
  %743 = vmatprep.subr.mxu0 0.0
  %744 = vmatpush1.msra.mxu0 0.0
  %745 = vmatprep.subr.mxu0 0.0
  %746 = vmatpush1.msra.mxu0 0.0
  %747 = vmatprep.subr.mxu0 0.0
  %748 = vmatpush1.msra.mxu0 0.0
  %749 = vmatprep.subr.mxu0 0.0
  %750 = vmatpush1.msra.mxu0 0.0
  %751 = vmatprep.subr.mxu0 0.0
  %752 = vmatpush1.msra.mxu0 0.0
  %753 = vmatprep.mubr.f32.mxu0 0.0
  %754 = vmatmul.mubr.f32.gmra.mrb[0].mxu0 %v616
  %v755 = vpop.f32.mrb[0].mxu0
  %v756 = vadd.f32 0.0, %v755
  %v757 = vpop.f32.mrb[0].mxu0
  %v758 = vadd.f32 0.0, %v757
  %759 = vdwg.mxu0
  %v760 = vmax.f32 %v685, 0.0
  %v761 = vmax.f32 %v687, 0.0
  %v762 = vmax.f32 %v756, 0.0
  %v763 = vmax.f32 %v758, 0.0
  %v764 = vmul.f32 %v760, %v191
  %v765 = vmul.f32 %v761, %v195
  %v766 = vmul.f32 %v762, %v199
  %v767 = vmul.f32 %v763, %v203
  %768 = vst [vmem:[#allocation3] sm:$0xff] %v764
  %769 = vst [vmem:[#allocation3 + $0x8] sm:$0xff] %v765
  %770 = vst [vmem:[#allocation3 + $0x10] sm:$0xff] %v766
  %771 = vst [vmem:[#allocation3 + $0x18] sm:$0xff] %v767
  %v772 = vld [vmem:[%s0 + $0x40] sm:$0xff]
  %v773 = vld [vmem:[%s0 + $0x48] sm:$0xff]
  %v774 = vld [vmem:[%s0 + $0x50] sm:$0xff]
  %v775 = vld [vmem:[%s0 + $0x58] sm:$0xff]
  %776 = vst [vmem:[#allocation3 + $0x20] sm:$0xff] %v772
  %777 = vst [vmem:[#allocation3 + $0x28] sm:$0xff] %v773
  %778 = vst [vmem:[#allocation3 + $0x30] sm:$0xff] %v774
  %779 = vst [vmem:[#allocation3 + $0x38] sm:$0xff] %v775
  %v780 = vld [vmem:[%s3] sm:$0xff]
  %v781 = vld [vmem:[%s3 + $0x8] sm:$0xff]
  %v782 = vld [vmem:[#allocation3] sm:$0xff]
  %v783 = vld [vmem:[#allocation3 + $0x8] sm:$0xff]
  %v784 = vld [vmem:[#allocation3 + $0x10] sm:$0xff]
  %v785 = vld [vmem:[#allocation3 + $0x18] sm:$0xff]
  %v786 = vld [vmem:[#allocation3 + $0x20] sm:$0xff]
  %v787 = vld [vmem:[#allocation3 + $0x28] sm:$0xff]
  %v788 = vld [vmem:[#allocation3 + $0x30] sm:$0xff]
  %v789 = vld [vmem:[#allocation3 + $0x38] sm:$0xff]
  %v790 = vld [vmem:[%s0] sm:$0xff]
  %v791 = vld [vmem:[%s0 + $0x8] sm:$0xff]
  %v792 = vld [vmem:[%s0 + $0x10] sm:$0xff]
  %v793 = vld [vmem:[%s0 + $0x18] sm:$0xff]
  %v794 = vld [vmem:[%s0 + $0x20] sm:$0xff]
  %v795 = vld [vmem:[%s0 + $0x28] sm:$0xff]
  %v796 = vld [vmem:[%s0 + $0x30] sm:$0xff]
  %v797 = vld [vmem:[%s0 + $0x38] sm:$0xff]
  %vm798 = vcmask 130048
  %v800 = vsel %vm798, %v780, 0
  %v803 = vsel %vm798, %v781, 0
  %805 = vmatprep.subr.mxu0 %v783
  %806 = vmatpush1.msra.mxu0 %v782
  %807 = vmatprep.subr.mxu0 %v787
  %808 = vmatpush1.msra.mxu0 %v786
  %809 = vmatprep.subr.mxu0 0.0
  %810 = vmatpush1.msra.mxu0 0.0
  %811 = vmatprep.subr.mxu0 0.0
  %812 = vmatpush1.msra.mxu0 0.0
  %813 = vmatprep.subr.mxu0 0.0
  %814 = vmatpush1.msra.mxu0 0.0
  %815 = vmatprep.subr.mxu0 0.0
  %816 = vmatpush1.msra.mxu0 0.0
  %817 = vmatprep.subr.mxu0 0.0
  %818 = vmatpush1.msra.mxu0 0.0
  %819 = vmatprep.subr.mxu0 0.0
  %820 = vmatpush1.msra.mxu0 0.0
  %821 = vmatprep.subr.mxu0 0.0
  %822 = vmatpush1.msra.mxu0 0.0
  %823 = vmatprep.subr.mxu0 0.0
  %824 = vmatpush1.msra.mxu0 0.0
  %825 = vmatprep.subr.mxu0 0.0
  %826 = vmatpush1.msra.mxu0 0.0
  %827 = vmatprep.subr.mxu0 0.0
  %828 = vmatpush1.msra.mxu0 0.0
  %829 = vmatprep.subr.mxu0 0.0
  %830 = vmatpush1.msra.mxu0 0.0
  %831 = vmatprep.subr.mxu0 0.0
  %832 = vmatpush1.msra.mxu0 0.0
  %833 = vmatprep.subr.mxu0 0.0
  %834 = vmatpush1.msra.mxu0 0.0
  %835 = vmatprep.subr.mxu0 0.0
  %836 = vmatpush1.msra.mxu0 0.0
  %837 = vmatprep.subr.mxu0 0.0
  %838 = vmatpush1.msra.mxu0 0.0
  %839 = vmatprep.subr.mxu0 0.0
  %840 = vmatpush1.msra.mxu0 0.0
  %841 = vmatprep.subr.mxu0 0.0
  %842 = vmatpush1.msra.mxu0 0.0
  %843 = vmatprep.subr.mxu0 0.0
  %844 = vmatpush1.msra.mxu0 0.0
  %845 = vmatprep.subr.mxu0 0.0
  %846 = vmatpush1.msra.mxu0 0.0
  %847 = vmatprep.subr.mxu0 0.0
  %848 = vmatpush1.msra.mxu0 0.0
  %849 = vmatprep.subr.mxu0 0.0
  %850 = vmatpush1.msra.mxu0 0.0
  %851 = vmatprep.subr.mxu0 0.0
  %852 = vmatpush1.msra.mxu0 0.0
  %853 = vmatprep.subr.mxu0 0.0
  %854 = vmatpush1.msra.mxu0 0.0
  %855 = vmatprep.subr.mxu0 0.0
  %856 = vmatpush1.msra.mxu0 0.0
  %857 = vmatprep.subr.mxu0 0.0
  %858 = vmatpush1.msra.mxu0 0.0
  %859 = vmatprep.subr.mxu0 0.0
  %860 = vmatpush1.msra.mxu0 0.0
  %861 = vmatprep.subr.mxu0 0.0
  %862 = vmatpush1.msra.mxu0 0.0
  %863 = vmatprep.subr.mxu0 0.0
  %864 = vmatpush1.msra.mxu0 0.0
  %865 = vmatprep.subr.mxu0 0.0
  %866 = vmatpush1.msra.mxu0 0.0
  %867 = vmatprep.subr.mxu0 0.0
  %868 = vmatpush1.msra.mxu0 0.0
  %869 = vmatprep.mubr.f32.mxu0 0.0
  %870 = vmatmul.mubr.f32.gmra.mrb[0].mxu0 %v800
  %v871 = vpop.f32.mrb[0].mxu0
  %v872 = vadd.f32 %v790, %v871
  %v873 = vpop.f32.mrb[0].mxu0
  %v874 = vadd.f32 %v791, %v873
  %875 = vmatprep.mubr.f32.mxu0 0.0
  %876 = vmatmul.mubr.f32.gmra.mrb[0].mxu0 %v803
  %v877 = vpop.f32.mrb[0].mxu0
  %v878 = vadd.f32 %v794, %v877
  %v879 = vpop.f32.mrb[0].mxu0
  %v880 = vadd.f32 %v795, %v879
  %881 = vdwg.mxu0
  %882 = vmatprep.subr.mxu0 %v785
  %883 = vmatpush1.msra.mxu0 %v784
  %884 = vmatprep.subr.mxu0 %v789
  %885 = vmatpush1.msra.mxu0 %v788
  %886 = vmatprep.subr.mxu0 0.0
  %887 = vmatpush1.msra.mxu0 0.0
  %888 = vmatprep.subr.mxu0 0.0
  %889 = vmatpush1.msra.mxu0 0.0
  %890 = vmatprep.subr.mxu0 0.0
  %891 = vmatpush1.msra.mxu0 0.0
  %892 = vmatprep.subr.mxu0 0.0
  %893 = vmatpush1.msra.mxu0 0.0
  %894 = vmatprep.subr.mxu0 0.0
  %895 = vmatpush1.msra.mxu0 0.0
  %896 = vmatprep.subr.mxu0 0.0
  %897 = vmatpush1.msra.mxu0 0.0
  %898 = vmatprep.subr.mxu0 0.0
  %899 = vmatpush1.msra.mxu0 0.0
  %900 = vmatprep.subr.mxu0 0.0
  %901 = vmatpush1.msra.mxu0 0.0
  %902 = vmatprep.subr.mxu0 0.0
  %903 = vmatpush1.msra.mxu0 0.0
  %904 = vmatprep.subr.mxu0 0.0
  %905 = vmatpush1.msra.mxu0 0.0
  %906 = vmatprep.subr.mxu0 0.0
  %907 = vmatpush1.msra.mxu0 0.0
  %908 = vmatprep.subr.mxu0 0.0
  %909 = vmatpush1.msra.mxu0 0.0
  %910 = vmatprep.subr.mxu0 0.0
  %911 = vmatpush1.msra.mxu0 0.0
  %912 = vmatprep.subr.mxu0 0.0
  %913 = vmatpush1.msra.mxu0 0.0
  %914 = vmatprep.subr.mxu0 0.0
  %915 = vmatpush1.msra.mxu0 0.0
  %916 = vmatprep.subr.mxu0 0.0
  %917 = vmatpush1.msra.mxu0 0.0
  %918 = vmatprep.subr.mxu0 0.0
  %919 = vmatpush1.msra.mxu0 0.0
  %920 = vmatprep.subr.mxu0 0.0
  %921 = vmatpush1.msra.mxu0 0.0
  %922 = vmatprep.subr.mxu0 0.0
  %923 = vmatpush1.msra.mxu0 0.0
  %924 = vmatprep.subr.mxu0 0.0
  %925 = vmatpush1.msra.mxu0 0.0
  %926 = vmatprep.subr.mxu0 0.0
  %927 = vmatpush1.msra.mxu0 0.0
  %928 = vmatprep.subr.mxu0 0.0
  %929 = vmatpush1.msra.mxu0 0.0
  %930 = vmatprep.subr.mxu0 0.0
  %931 = vmatpush1.msra.mxu0 0.0
  %932 = vmatprep.subr.mxu0 0.0
  %933 = vmatpush1.msra.mxu0 0.0
  %934 = vmatprep.subr.mxu0 0.0
  %935 = vmatpush1.msra.mxu0 0.0
  %936 = vmatprep.subr.mxu0 0.0
  %937 = vmatpush1.msra.mxu0 0.0
  %938 = vmatprep.subr.mxu0 0.0
  %939 = vmatpush1.msra.mxu0 0.0
  %940 = vmatprep.subr.mxu0 0.0
  %941 = vmatpush1.msra.mxu0 0.0
  %942 = vmatprep.subr.mxu0 0.0
  %943 = vmatpush1.msra.mxu0 0.0
  %944 = vmatprep.subr.mxu0 0.0
  %945 = vmatpush1.msra.mxu0 0.0
  %946 = vmatprep.mubr.f32.mxu0 0.0
  %947 = vmatmul.mubr.f32.gmra.mrb[0].mxu0 %v800
  %v948 = vpop.f32.mrb[0].mxu0
  %v949 = vadd.f32 %v792, %v948
  %v950 = vpop.f32.mrb[0].mxu0
  %v951 = vadd.f32 %v793, %v950
  %952 = vmatprep.mubr.f32.mxu0 0.0
  %953 = vmatmul.mubr.f32.gmra.mrb[0].mxu0 %v803
  %v954 = vpop.f32.mrb[0].mxu0
  %v955 = vadd.f32 %v796, %v954
  %v956 = vpop.f32.mrb[0].mxu0
  %v957 = vadd.f32 %v797, %v956
  %958 = vdwg.mxu0
  %v959 = vmax.f32 %v872, 0.0
  %v960 = vmax.f32 %v874, 0.0
  %v961 = vmax.f32 %v949, 0.0
  %v962 = vmax.f32 %v951, 0.0
  %v963 = vmax.f32 %v878, 0.0
  %v964 = vmax.f32 %v880, 0.0
  %v965 = vmax.f32 %v955, 0.0
  %v966 = vmax.f32 %v957, 0.0
  %967 = vst [vmem:[%s6] sm:$0xff] %v959
  %968 = vst [vmem:[%s6 + $0x8] sm:$0xff] %v960
  %969 = vst [vmem:[%s6 + $0x10] sm:$0xff] %v961
  %970 = vst [vmem:[%s6 + $0x18] sm:$0xff] %v962
  %971 = vst [vmem:[%s6 + $0x20] sm:$0xff] %v963
  %972 = vst [vmem:[%s6 + $0x28] sm:$0xff] %v964
  %973 = vst [vmem:[%s6 + $0x30] sm:$0xff] %v965
  %974 = vst [vmem:[%s6 + $0x38] sm:$0xff] %v966
  // Predicated region
  $region26: #{decay_bottleneck_forward.1} parent=0 // pred_check
    _
  $region27: #{decay_bottleneck_forward.1} parent=0 // pred_check_branch
    %976 = sbr.rel (0) target = $region29
  $region28: #{decay_bottleneck_forward.1} parent=0 // pred_region
    _
  $region29: #{decay_bottleneck_forward.1} parent=0 // pred_fallthru
    _
  // Predicated region
  $region30: #{decay_bottleneck_forward.1} parent=0 // pred_check
    _
  $region31: #{decay_bottleneck_forward.1} parent=0 // pred_check_branch
    %978 = sbr.rel (0) target = $region33
  $region32: #{decay_bottleneck_forward.1} parent=0 // pred_region
    _
  $region33: #{decay_bottleneck_forward.1} parent=0 // pred_fallthru
    _

</llo_original>
